<compile_context>
chip_gen: v7x
topology: tpu7x:2x2x1
jax: 0.10.0
libtpu: 0.0.40
codegen_flags: <defaults>
</compile_context>

<pallas_src>
import functools
import math

import jax
import jax.numpy as jnp
from jax.experimental import pallas as pl
from jax.experimental.pallas import tpu as pltpu

_LN2 = math.log(2.0)


def _bce_partial_kernel(rows, tr, t_ref, x_ref, out_ref):
    """Per-tile BCE-with-logits partial sums.

    t_ref:   SMEM (1,) f32   -- broadcast target value (0.0 or 1.0)
    x_ref:   VMEM (tr, 128)  -- logits tile (native dtype, cast here)
    out_ref: VMEM (8, 128) f32 -- per-lane partial sums for this tile
                                  (row 0 holds the lane sums, rows 1..7 = 0)
    """
    i = pl.program_id(0)
    x = x_ref[...].astype(jnp.float32)
    t = t_ref[0]

    # Numerically stable BCE-with-logits (matches torch.nn.BCEWithLogitsLoss):
    #   loss = max(x, 0) - x * t + log1p(exp(-|x|))
    elem = jnp.maximum(x, 0.0) - x * t + jnp.log1p(jnp.exp(-jnp.abs(x)))

    # Only the last tile can be a partial block (out-of-bounds rows contain
    # garbage). `rows % tr` is static, so this mask is traced only when needed.
    if rows % tr != 0:
        valid_rows = rows - i * tr  # >= tr for all but the last tile
        row = jax.lax.broadcasted_iota(jnp.int32, (tr, 128), 0)
        elem = jnp.where(row < valid_rows, elem, 0.0)

    # Reduce over rows (mostly VPU adds across sublane groups + one cheap XLU
    # sublane reduce) -> (1, 128) per-lane partials, placed in row 0 of the
    # (8, 128)-aligned output block.
    part = jnp.sum(elem, axis=0, keepdims=True)  # (1, 128) f32
    out_row = jax.lax.broadcasted_iota(jnp.int32, (8, 128), 0)
    out_ref[...] = jnp.where(out_row == 0, part, 0.0)


@functools.partial(jax.jit, static_argnames=("is_disc",))
def adversarial_loss(x, target, is_disc=False, weight=2e-5):
    """Forward of AdversarialLoss.

    x:       logits, any shape (e.g. NCHW [B, C, H, W]), any float dtype
    target:  scalar (0/1) broadcast as the BCE target
    is_disc: if False, multiply the mean BCE loss by `weight`
    """
    n = x.size
    flat = x.reshape(-1)  # native dtype; cast happens inside the kernel

    # Pad (only if needed) up to a multiple of 8*128 so the 2-D slab is
    # (8, 128)-aligned. Zero logits contribute exactly log(2) each regardless
    # of the target, corrected after the kernel -> no per-element mask needed.
    pad_n = ((n + 1023) // 1024) * 1024
    if pad_n != n:
        # TODO(synk): a tail-only kernel would avoid this full-array copy for
        # non-1024-aligned sizes; common conv-shaped inputs take the no-pad path.
        flat = jnp.pad(flat, (0, pad_n - n))
    rows = pad_n // 128
    x2d = flat.reshape(rows, 128)

    # 2048 rows x 128 lanes x 4 B = 1 MiB f32 per block; double-buffered this
    # stays far below the scoped-VMEM limit on v5e/v6e/v7x.
    tr = min(2048, rows)
    num_tiles = pl.cdiv(rows, tr)

    t_arr = jnp.asarray(target, jnp.float32).reshape(1)

    partials = pl.pallas_call(
        functools.partial(_bce_partial_kernel, rows, tr),
        out_shape=jax.ShapeDtypeStruct((num_tiles * 8, 128), jnp.float32),
        grid=(num_tiles,),
        in_specs=[
            pl.BlockSpec(memory_space=pltpu.SMEM),
            pl.BlockSpec((tr, 128), lambda i: (i, 0)),
        ],
        out_specs=pl.BlockSpec((8, 128), lambda i: (i, 0)),
        compiler_params=pltpu.CompilerParams(
            dimension_semantics=("parallel",),
        ),
    )(t_arr, x2d)

    total = jnp.sum(partials)
    if pad_n != n:
        total = total - jnp.float32((pad_n - n) * _LN2)

    loss = total / jnp.float32(n)  # BCEWithLogitsLoss default reduction: mean
    return loss if is_disc else loss * jnp.float32(weight)


def _reference(x, target, is_disc=False, weight=2e-5):
    x = x.astype(jnp.float32)
    t = jnp.ones_like(x) * jnp.float32(target)
    elem = jnp.maximum(x, 0.0) - x * t + jnp.log1p(jnp.exp(-jnp.abs(x)))
    loss = jnp.mean(elem)
    return loss if is_disc else loss * jnp.float32(weight)


if __name__ == "__main__":
    key = jax.random.PRNGKey(0)
    x = jax.random.normal(key, (2, 4, 16, 16), dtype=jnp.float32)  # NCHW logits

    # Generator path (is_disc=False -> loss * weight), target = real (1)
    out_gen = adversarial_loss(x, 1, is_disc=False)
    # Discriminator path (is_disc=True -> raw BCE loss), target = fake (0)
    out_disc = adversarial_loss(x, 0, is_disc=True)
    jax.block_until_ready((out_gen, out_disc))

    ref_gen = _reference(x, 1, is_disc=False)
    ref_disc = _reference(x, 0, is_disc=True)

    assert jnp.allclose(out_gen, ref_gen, rtol=1e-5, atol=1e-7), (out_gen, ref_gen)
    assert jnp.allclose(out_disc, ref_disc, rtol=1e-5, atol=1e-6), (out_disc, ref_disc)

    print("KERNEL_OK")
</pallas_src>

<mosaic_0001>
module attributes {stable_mosaic.version = 11 : i64} {
  func.func @_bce_partial_kernel(%arg0: i32, %arg1: memref<1xf32, #tpu.memory_space<smem>>, %arg2: memref<16x128xf32, #tpu.memory_space<vmem>>, %arg3: memref<8x128xf32, #tpu.memory_space<vmem>>) attributes {dimension_semantics = [#tpu.dimension_semantics<parallel>], iteration_bounds = array<i64: 1>, scalar_prefetch = 0 : i64, scratch_operands = 0 : i64, tpu.core_type = #tpu.core_type<tc>, window_params = [{transform_indices = @transform_0, window_bounds = array<i64: 1>}, {transform_indices = @transform_1, window_bounds = array<i64: 16, 128>}, {transform_indices = @transform_2, window_bounds = array<i64: 8, 128>}]} {
    %c0 = arith.constant 0 : index
    %c0_0 = arith.constant 0 : index
    %0 = vector.load %arg2[%c0, %c0_0] : memref<16x128xf32, #tpu.memory_space<vmem>>, vector<16x128xf32>
    %c0_1 = arith.constant 0 : index
    %1 = memref.load %arg1[%c0_1] : memref<1xf32, #tpu.memory_space<smem>>
    %cst = arith.constant 0.000000e+00 : f32
    %2 = vector.broadcast %cst : f32 to vector<16x128xf32>
    %3 = arith.maximumf %0, %2 : vector<16x128xf32>
    %4 = vector.broadcast %1 : f32 to vector<16x128xf32>
    %5 = arith.mulf %0, %4 : vector<16x128xf32>
    %6 = arith.subf %3, %5 : vector<16x128xf32>
    %7 = math.absf %0 : vector<16x128xf32>
    %cst_2 = arith.constant 0.000000e+00 : f32
    %8 = vector.broadcast %cst_2 : f32 to vector<16x128xf32>
    %9 = arith.subf %8, %7 : vector<16x128xf32>
    %10 = math.exp %9 : vector<16x128xf32>
    %11 = math.log1p %10 : vector<16x128xf32>
    %12 = arith.addf %6, %11 : vector<16x128xf32>
    %cst_3 = arith.constant dense<0.000000e+00> : vector<128xf32>
    %13 = vector.multi_reduction <add>, %12, %cst_3 [0] : vector<16x128xf32> to vector<128xf32>
    %14 = vector.shape_cast %13 : vector<128xf32> to vector<1x128xf32>
    %15 = tpu.iota {dimensions = array<i32: 0>} : vector<8x128xi32>
    %c0_i32 = arith.constant 0 : i32
    %16 = vector.broadcast %c0_i32 : i32 to vector<8x128xi32>
    %17 = arith.cmpi eq, %15, %16 : vector<8x128xi32>
    %cst_4 = arith.constant 0.000000e+00 : f32
    %18 = vector.shape_cast %14 : vector<1x128xf32> to vector<1x128xf32>
    %19 = vector.broadcast %18 : vector<1x128xf32> to vector<8x128xf32>
    %20 = vector.broadcast %cst_4 : f32 to vector<8x128xf32>
    %21 = arith.select %17, %19, %20 : vector<8x128xi1>, vector<8x128xf32>
    %c0_5 = arith.constant 0 : index
    %c0_6 = arith.constant 0 : index
    %22 = vector.load %arg3[%c0_5, %c0_6] : memref<8x128xf32, #tpu.memory_space<vmem>>, vector<8x128xf32>
    tpu.vector_store %arg3[%c0_5, %c0_6], %21 {strides = array<i32>} : memref<8x128xf32, #tpu.memory_space<vmem>>, vector<8x128xf32>,
    return
  }
  func.func @transform_0(%arg0: i32) -> i32 {
    %c0_i32 = arith.constant 0 : i32
    %c0_i32_0 = arith.constant 0 : i32
    return %c0_i32 : i32
  }
  func.func @transform_1(%arg0: i32) -> (i32, i32) {
    %c0_i32 = arith.constant 0 : i32
    %c0_i32_0 = arith.constant 0 : i32
    return %arg0, %c0_i32 : i32, i32
  }
  func.func @transform_2(%arg0: i32) -> (i32, i32) {
    %c0_i32 = arith.constant 0 : i32
    %c0_i32_0 = arith.constant 0 : i32
    return %arg0, %c0_i32 : i32, i32
  }
}

</mosaic_0001>

<llo_original>
// kernel: adversarial_loss.1
$region0: #{adversarial_loss.1}
  #allocation0 [shape = 'u32[]', space=smem, size = 0x4, offset = 0x4, fixed_abs, tag = 'smem constant byte address 0x4 - core index']
  #allocation1 [shape = 'u32[144,128]{1,0:T(1,128)}', space=vmem, size = 0x12000, scoped, tag = 'internal scratch']
  #allocation2 [shape = 'f32[1]{0:T(128)S(6)}', space=smem, size = 0x200, scoped, tag = 'scoped memory for adversarial_loss.1']
  %s0 = inlined_call_operand.<no memory space> [shape: f32[1], index: 0, kind: input, shape index: {}]
  %s1 = inlined_call_operand.vmem [shape: f32[16,128], index: 1, kind: input, shape index: {}]
  %s2 = inlined_call_operand.vmem [shape: f32[8,128], index: 2, kind: output, shape index: {}]
  %s3 = sld [smem:[#allocation0]]
  $region18: #{adversarial_loss.1} parent=0
    _
  %s5 = ssub.s32 1, %s3
  %s6 = scalar_select 0, %s5, %s3
  %7 = sst [smem:[#allocation2]] %s0
  // Predicated region
  $region2: #{adversarial_loss.1} parent=0 // pred_check
    _
  $region3: #{adversarial_loss.1} parent=0 // pred_check_branch
    %9 = sbr.rel (0) target = $region5
  $region4: #{adversarial_loss.1} parent=0 // pred_region
    _
  $region5: #{adversarial_loss.1} parent=0 // pred_fallthru
    _
  // Predicated region
  $region6: #{adversarial_loss.1} parent=0 // pred_check
    _
  $region7: #{adversarial_loss.1} parent=0 // pred_check_branch
    %11 = sbr.rel (0) target = $region9
  $region8: #{adversarial_loss.1} parent=0 // pred_region
    _
  $region9: #{adversarial_loss.1} parent=0 // pred_fallthru
    _
  %v12 = vld [vmem:[%s1] sm:$0xff]
  %v13 = vld [vmem:[%s1 + $0x8] sm:$0xff]
  %s14 = sld [smem:[#allocation2]]
  %v15 = vmax.f32 %v12, 0.0
  %v16 = vmax.f32 %v13, 0.0
  %v17 = vstv %s14
  %v18 = vmul.f32 %v12, %v17
  %v19 = vmul.f32 %v13, %v17
  %v20 = vsub.f32 %v15, %v18
  %v21 = vsub.f32 %v16, %v19
  %v22 = vand.u32 2147483647, %v12
  %v23 = vand.u32 2147483647, %v13
  %v24 = vsub.f32 0.0, %v22
  %v25 = vsub.f32 0.0, %v23
  %v26 = vmul.f32 %v24, 1.442695
  %v27 = vpow.pop %v26
  %v28 = vmul.f32 %v25, 1.442695
  %v29 = vpow.pop %v28
  %v30 = vadd.f32 %v27, 1.0
  %v31 = vlog2.pop %v30
  %v32 = vmul.f32 %v31, 0.6931472
  %v33 = vmul.f32 -0.5, %v27
  %v34 = vadd.f32 %v33, 1.0
  %v35 = vmul.f32 %v34, %v27
  %v36 = vand.u32 2147483647, %v27
  %vm37 = vcmp.lt.f32.partialorder %v36, 0.0004427343
  %v38 = vsel %vm37, %v35, %v32
  %v39 = vadd.f32 %v29, 1.0
  %v40 = vlog2.pop %v39
  %v41 = vmul.f32 %v40, 0.6931472
  %v42 = vmul.f32 -0.5, %v29
  %v43 = vadd.f32 %v42, 1.0
  %v44 = vmul.f32 %v43, %v29
  %v45 = vand.u32 2147483647, %v29
  %vm46 = vcmp.lt.f32.partialorder %v45, 0.0004427343
  %v47 = vsel %vm46, %v44, %v41
  %v48 = vadd.f32 %v20, %v38
  %v49 = vadd.f32 %v21, %v47
  %v50 = vadd.f32 %v48, %v49
  %v51 = vrot.slane %v50, 4
  %v52 = vadd.f32 %v50, %v51
  %v53 = vrot.slane %v52, 2
  %v54 = vadd.f32 %v52, %v53
  %v55 = vrot.slane %v54, 1
  %v56 = vadd.f32 %v54, %v55
  %v57 = vlaneseq
  %v58 = vshrl.u32 %v57, 7
  %vm59 = vcmp.eq.s32.totalorder %v58, 0
  %v60 = vsel %vm59, %v56, 0.0
  %61 = vst [vmem:[%s2] sm:$0xff] %v60
  // Predicated region
  $region10: #{adversarial_loss.1} parent=0 // pred_check
    _
  $region11: #{adversarial_loss.1} parent=0 // pred_check_branch
    %63 = sbr.rel (0) target = $region13
  $region12: #{adversarial_loss.1} parent=0 // pred_region
    _
  $region13: #{adversarial_loss.1} parent=0 // pred_fallthru
    _
  // Predicated region
  $region14: #{adversarial_loss.1} parent=0 // pred_check
    _
  $region15: #{adversarial_loss.1} parent=0 // pred_check_branch
    %65 = sbr.rel (0) target = $region17
  $region16: #{adversarial_loss.1} parent=0 // pred_region
    _
  $region17: #{adversarial_loss.1} parent=0 // pred_fallthru
    _

</llo_original>
